<compile_context>
chip_gen: v7x
topology: tpu7x:2x2x1
jax: 0.10.0
libtpu: 0.0.40
codegen_flags: <defaults>
</compile_context>

<pallas_src>
import jax
import jax.numpy as jnp
from jax.experimental import pallas as pl
from jax.experimental.pallas import tpu as pltpu


def _round_up(x, m):
    return (x + m - 1) // m * m


# ----------------------------- Pallas kernel ------------------------------ #

def _cut_relevance_kernel(feat_ref, w_ref, b_ref, rel_ref):
    """Fused subj/obj embedding MLP + collapsed MHA projection + relevance."""
    f_pad = feat_ref.shape[1]                  # padded feature dim
    bg, n, _ = rel_ref.shape                   # images in this step, objects
    e2 = w_ref.shape[1]                        # 2 * embed_dim (subj | obj fused)
    e = e2 // 2

    feat = feat_ref[...]                       # (Bg*N, F_pad) bf16
    biases = b_ref[...]                        # (2, 2E) f32

    # Static, sublane-tile-aligned row views of the packed bf16 weight slab
    # (F_pad is a multiple of 16, so both views start on a bf16 tile boundary).
    w1 = w_ref[0:f_pad, :]                     # (F_pad, 2E)  [s_w1 | o_w1]
    wf = w_ref[f_pad:f_pad + e2, :]            # (2E,   2E)  blkdiag(W2@Wv@Wo)

    # Fused subject/object chain: Linear -> ReLU -> (pre-composed) Linear.
    h = jnp.dot(feat, w1, preferred_element_type=jnp.float32) + biases[0:1, :]
    h = jnp.maximum(h, 0.0)
    out = jnp.dot(h.astype(jnp.bfloat16), wf,
                  preferred_element_type=jnp.float32) + biases[1:2, :]

    # (Bg*N, 2E) -> (Bg, N, 2E): N is a multiple of 8 so the sublane split is
    # tile-aligned.  Then split fused columns into subj / obj and contract
    # over the embedding dim (batched; contraction on both minor dims — at
    # these sizes any internal relayout of the RHS rides the idle XLU slot).
    out = out.reshape(bg, n, e2)
    subj = out[:, :, :e].astype(jnp.bfloat16)
    obj = out[:, :, e:].astype(jnp.bfloat16)
    # TODO(synk): if N grows to 64-128+ make this writeback lane-dense (pad
    # the last dim to 128 or emit (Bg, N*N)); at N=16 it is a 2 KiB store.
    rel_ref[...] = jnp.einsum("bne,bme->bnm", subj, obj,
                              preferred_element_type=jnp.float32)


def cut_relevance(features, wslab, bslab, *, num_blocks=1):
    """features: (B, N, F_pad) bf16 -> relevance (B, N, N) f32.

    num_blocks > 1 splits the batch across grid steps marked "parallel"
    (only useful on v7x once Bg*N per step is >= ~512 rows); default 1 keeps
    the whole batch in a single step, which is optimal at small sizes.
    """
    B, N, F_pad = features.shape
    assert B % num_blocks == 0
    assert N % 8 == 0, "object count per image must be a multiple of 8"
    Bg = B // num_blocks

    # Metadata-only HBM flatten; the kernel sees a clean 2-D row-block.
    feat_flat = features.reshape(B * N, F_pad)

    return pl.pallas_call(
        _cut_relevance_kernel,
        out_shape=jax.ShapeDtypeStruct((B, N, N), jnp.float32),
        grid_spec=pltpu.PrefetchScalarGridSpec(
            num_scalar_prefetch=0,
            grid=(num_blocks,),
            in_specs=[
                pl.BlockSpec((Bg * N, F_pad), lambda g: (g, 0)),
                pl.BlockSpec(wslab.shape, lambda g: (0, 0)),
                pl.BlockSpec(bslab.shape, lambda g: (0, 0)),
            ],
            out_specs=pl.BlockSpec((Bg, N, N), lambda g: (g, 0, 0)),
        ),
        compiler_params=pltpu.CompilerParams(
            dimension_semantics=("parallel",)),
    )(feat_flat, wslab, bslab)


# --------------------------- weight slab packing --------------------------- #

def pack_params(subj_params, obj_params):
    """One-time (init-time) host-side packing.

    Composes, per branch and in f32, the three bias-separated post-ReLU
    linears (MLP Linear2, MHA value-proj, MHA out-proj) into one matrix/bias,
    fuses subj/obj into block-diagonal columns, and pads F to a multiple of
    16 so the kernel's row slices stay bf16-tile-aligned for any obj_classes.

    wslab rows:  [ W1_cat (F_pad x 2E) ; blkdiag(W2@Wv@Wo) (2E x 2E) ]  bf16
    bslab rows:  [ b1_cat ; b2@Wv@Wo + bv@Wo + bo (cat) ]  (2 x 2E)    f32
    """
    E = subj_params["w2"].shape[0]
    F = subj_params["w1"].shape[0]
    F_pad = _round_up(F, 16)
    z = jnp.zeros((E, E), jnp.float32)

    def blockdiag(a, b):
        top = jnp.concatenate([a, z], axis=1)
        bot = jnp.concatenate([z, b], axis=1)
        return jnp.concatenate([top, bot], axis=0)          # (2E, 2E)

    def compose(p):
        wf = p["w2"] @ p["wv"] @ p["wo"]                     # (E, E)
        bf = p["b2"] @ p["wv"] @ p["wo"] + p["bv"] @ p["wo"] + p["bo"]  # (1, E)
        return wf, bf

    s_wf, s_bf = compose(subj_params)
    o_wf, o_bf = compose(obj_params)

    w1_cat = jnp.concatenate([subj_params["w1"], obj_params["w1"]], axis=1)
    w1_cat = jnp.pad(w1_cat, ((0, F_pad - F), (0, 0)))       # (F_pad, 2E)

    wslab = jnp.concatenate([w1_cat, blockdiag(s_wf, o_wf)],
                            axis=0).astype(jnp.bfloat16)     # (F_pad + 2E, 2E)

    bslab = jnp.concatenate(
        [jnp.concatenate([subj_params["b1"], obj_params["b1"]], axis=1),
         jnp.concatenate([s_bf, o_bf], axis=1)],
        axis=0).astype(jnp.float32)                          # (2, 2E)
    return wslab, bslab


# ------------------------------- JAX glue ---------------------------------- #

def encode_bbox(bboxes, im_size):
    width = im_size[0]
    height = im_size[1]
    d0 = bboxes[:, 0] / width
    d1 = bboxes[:, 1] / height
    d2 = bboxes[:, 2] / width
    d3 = bboxes[:, 3] / height
    d4 = (bboxes[:, 2] - bboxes[:, 0]) * (bboxes[:, 3] - bboxes[:, 1]) / height / width
    d5 = (bboxes[:, 3] - bboxes[:, 1]) / (bboxes[:, 2] - bboxes[:, 0] + 1.0)
    return jnp.stack((d0, d1, d2, d3, d4, d5), axis=1)


def bce_with_logits_mean(logits, targets):
    # numerically stable BCEWithLogitsLoss(reduction='mean')
    return jnp.mean(jnp.maximum(logits, 0.0) - logits * targets
                    + jnp.log1p(jnp.exp(-jnp.abs(logits))))


def cut_forward(obj_labels, bboxes, im_sizes, tgt_rel_matrices,
                wslab, bslab, obj_classes,
                num_pair_proposals=64, training=True, num_blocks=1):
    """Mirrors CUT.forward in 'predcls' mode.

    obj_labels:        (B, N) int32 ground-truth labels
    bboxes:            (B, N, 4) float32 xyxy boxes
    im_sizes:          (B, 2) or list of (width, height)
    tgt_rel_matrices:  (B, N, N) float32 relation matrices (>0 where related)
    wslab, bslab:      pre-packed parameter slabs from pack_params (init-time)
    Returns stacked (B, K) rel_labels, (B, K, 2) rel_pair_idxs, scalar loss.
    """
    B, N = obj_labels.shape
    k = min(num_pair_proposals, N * N)

    # predcls: one-hot logits with zeros replaced by -1
    eye = jnp.eye(obj_classes, dtype=jnp.float32)
    obj_logits = eye[obj_labels]                             # (B, N, C)
    obj_logits = jnp.where(obj_logits == 0, -1.0, obj_logits)

    im_sizes_arr = jnp.asarray(im_sizes, dtype=jnp.float32)  # (B, 2)
    bbox_enc = jax.vmap(encode_bbox)(bboxes, im_sizes_arr)   # (B, N, 6)

    features = jnp.concatenate([obj_logits, bbox_enc], axis=-1)  # (B, N, F)

    # Zero-pad the feature dim up to the slab's padded F (the matching W1
    # rows are zero, so the math is unchanged).
    F = features.shape[-1]
    F_pad = wslab.shape[0] - wslab.shape[1]
    if F_pad > F:
        features = jnp.pad(features, ((0, 0), (0, 0), (0, F_pad - F)))

    # --- Pallas hot path: fused embeddings + collapsed MHA + relevance ----- #
    relevance = cut_relevance(features.astype(jnp.bfloat16), wslab, bslab,
                              num_blocks=num_blocks)         # (B, N, N) f32

    # top-k pair proposals per image
    flat = relevance.reshape(B, N * N)
    _, top_idx = jax.lax.top_k(flat, k)                      # (B, K)
    heads = top_idx // N
    tails = top_idx % N
    rel_pair_idxs = jnp.stack([heads, tails], axis=-1)       # (B, K, 2)

    if training:
        rel_binary = (tgt_rel_matrices > 0).astype(jnp.float32)
        cut_losses = jnp.sum(jax.vmap(bce_with_logits_mean)(relevance, rel_binary))
        rel_labels = jax.vmap(lambda m, h, t: m[h, t])(
            tgt_rel_matrices, heads, tails)                  # (B, K)
        return rel_labels, rel_pair_idxs, cut_losses
    return rel_pair_idxs


# ---------------------------- param construction --------------------------- #

def make_branch_params(key, in_dim, embed_dim):
    ks = jax.random.split(key, 8)
    s = 0.1
    return {
        "w1": s * jax.random.normal(ks[0], (in_dim, embed_dim), jnp.float32),
        "b1": s * jax.random.normal(ks[1], (1, embed_dim), jnp.float32),
        "w2": s * jax.random.normal(ks[2], (embed_dim, embed_dim), jnp.float32),
        "b2": s * jax.random.normal(ks[3], (1, embed_dim), jnp.float32),
        # MHA value-projection and output-projection linears (the only MHA
        # weights that affect the output when seq_len == 1).
        "wv": s * jax.random.normal(ks[4], (embed_dim, embed_dim), jnp.float32),
        "bv": s * jax.random.normal(ks[5], (1, embed_dim), jnp.float32),
        "wo": s * jax.random.normal(ks[6], (embed_dim, embed_dim), jnp.float32),
        "bo": s * jax.random.normal(ks[7], (1, embed_dim), jnp.float32),
    }


# ----------------------------------- main ----------------------------------- #

if __name__ == "__main__":
    obj_classes = 10
    embed_dim = 32
    B, N = 2, 16
    F = obj_classes + 6
    num_pair_proposals = 64

    key = jax.random.PRNGKey(0)
    k_lbl, k_box, k_rel, k_subj, k_obj = jax.random.split(key, 5)

    obj_labels = jax.random.randint(k_lbl, (B, N), 0, obj_classes, jnp.int32)

    # xyxy boxes with x2 > x1, y2 > y1 inside (width=64, height=48) images
    width, height = 64.0, 48.0
    xy1 = jax.random.uniform(k_box, (B, N, 2)) * jnp.array([width * 0.5, height * 0.5])
    wh = 1.0 + jax.random.uniform(jax.random.fold_in(k_box, 1), (B, N, 2)) \
        * jnp.array([width * 0.4, height * 0.4])
    bboxes = jnp.concatenate([xy1, xy1 + wh], axis=-1).astype(jnp.float32)
    im_sizes = [(width, height)] * B

    # sparse ground-truth relation matrices (values > 0 are predicate labels)
    rel_raw = jax.random.uniform(k_rel, (B, N, N))
    tgt_rel_matrices = jnp.where(rel_raw > 0.9,
                                 jnp.floor(rel_raw * 50.0),
                                 0.0).astype(jnp.float32)

    subj_params = make_branch_params(k_subj, F, embed_dim)
    obj_params = make_branch_params(k_obj, F, embed_dim)

    # Init-time packing (hoisted out of the forward): compose post-ReLU
    # linears, fuse subj/obj, pad F to the bf16 sublane tile.
    wslab, bslab = pack_params(subj_params, obj_params)

    # num_blocks stays 1: at B*N = 32 rows the kernel is overhead-bound and
    # splitting across v7x's two TensorCores would only add step overhead.
    rel_labels, rel_pair_idxs, cut_losses = cut_forward(
        obj_labels, bboxes, im_sizes, tgt_rel_matrices,
        wslab, bslab, obj_classes,
        num_pair_proposals=num_pair_proposals, training=True, num_blocks=1)

    jax.block_until_ready(cut_losses)
    jax.block_until_ready(rel_pair_idxs)
    jax.block_until_ready(rel_labels)

    assert rel_pair_idxs.shape == (B, num_pair_proposals, 2)
    assert rel_labels.shape == (B, num_pair_proposals)
    assert bool(jnp.isfinite(cut_losses))

    print("KERNEL_OK")
</pallas_src>

<mosaic_0001>
module attributes {stable_mosaic.version = 11 : i64} {
  func.func @_cut_relevance_kernel(%arg0: i32, %arg1: memref<32x16xbf16, #tpu.memory_space<vmem>>, %arg2: memref<80x64xbf16, #tpu.memory_space<vmem>>, %arg3: memref<2x64xf32, #tpu.memory_space<vmem>>, %arg4: memref<2x16x16xf32, #tpu.memory_space<vmem>>) attributes {dimension_semantics = [#tpu.dimension_semantics<parallel>], iteration_bounds = array<i64: 1>, scalar_prefetch = 0 : i64, scratch_operands = 0 : i64, tpu.core_type = #tpu.core_type<tc>, window_params = [{transform_indices = @transform_0, window_bounds = array<i64: 32, 16>}, {pipeline_mode = #tpu.pipeline_mode<synchronous>, transform_indices = @transform_1, window_bounds = array<i64: 80, 64>}, {pipeline_mode = #tpu.pipeline_mode<synchronous>, transform_indices = @transform_2, window_bounds = array<i64: 2, 64>}, {transform_indices = @transform_3, window_bounds = array<i64: 2, 16, 16>}]} {
    %c0 = arith.constant 0 : index
    %c0_0 = arith.constant 0 : index
    %0 = vector.load %arg1[%c0, %c0_0] : memref<32x16xbf16, #tpu.memory_space<vmem>>, vector<32x16xbf16>
    %c0_1 = arith.constant 0 : index
    %c0_2 = arith.constant 0 : index
    %1 = vector.load %arg3[%c0_1, %c0_2] : memref<2x64xf32, #tpu.memory_space<vmem>>, vector<2x64xf32>
    %c0_3 = arith.constant 0 : index
    %c0_4 = arith.constant 0 : index
    %2 = vector.load %arg2[%c0_3, %c0_4] : memref<80x64xbf16, #tpu.memory_space<vmem>>, vector<16x64xbf16>
    %c16 = arith.constant 16 : index
    %c0_5 = arith.constant 0 : index
    %3 = vector.load %arg2[%c16, %c0_5] : memref<80x64xbf16, #tpu.memory_space<vmem>>, vector<64x64xbf16>
    %cst = arith.constant dense<0.000000e+00> : vector<32x64xf32>
    %4 = tpu.matmul %0, %2, %cst {dimension_numbers = #tpu.dot_dimension_numbers<[1], [0], [0], [1], [0, 0, 1, 1], [], []>} : vector<32x16xbf16>, vector<16x64xbf16>, vector<32x64xf32> -> vector<32x64xf32>
    %5 = vector.extract_strided_slice %1 {offsets = [0, 0], sizes = [1, 64], strides = [1, 1]} : vector<2x64xf32> to vector<1x64xf32>
    %6 = vector.broadcast %5 : vector<1x64xf32> to vector<32x64xf32>
    %7 = arith.addf %4, %6 : vector<32x64xf32>
    %cst_6 = arith.constant 0.000000e+00 : f32
    %8 = vector.broadcast %cst_6 : f32 to vector<32x64xf32>
    %9 = arith.maximumf %7, %8 : vector<32x64xf32>
    %10 = arith.truncf %9 : vector<32x64xf32> to vector<32x64xbf16>
    %cst_7 = arith.constant dense<0.000000e+00> : vector<32x64xf32>
    %11 = tpu.matmul %10, %3, %cst_7 {dimension_numbers = #tpu.dot_dimension_numbers<[1], [0], [0], [1], [0, 0, 1, 1], [], []>} : vector<32x64xbf16>, vector<64x64xbf16>, vector<32x64xf32> -> vector<32x64xf32>
    %12 = vector.extract_strided_slice %1 {offsets = [1, 0], sizes = [1, 64], strides = [1, 1]} : vector<2x64xf32> to vector<1x64xf32>
    %13 = vector.broadcast %12 : vector<1x64xf32> to vector<32x64xf32>
    %14 = arith.addf %11, %13 : vector<32x64xf32>
    %15 = vector.shape_cast %14 : vector<32x64xf32> to vector<2x16x64xf32>
    %16 = vector.extract_strided_slice %15 {offsets = [0, 0, 0], sizes = [2, 16, 32], strides = [1, 1, 1]} : vector<2x16x64xf32> to vector<2x16x32xf32>
    %17 = arith.truncf %16 : vector<2x16x32xf32> to vector<2x16x32xbf16>
    %18 = vector.extract_strided_slice %15 {offsets = [0, 0, 32], sizes = [2, 16, 32], strides = [1, 1, 1]} : vector<2x16x64xf32> to vector<2x16x32xf32>
    %19 = arith.truncf %18 : vector<2x16x32xf32> to vector<2x16x32xbf16>
    "tpu.trace_start"() <{level = 10 : i32, message = "bne,bme->bnm"}> : () -> ()
    %cst_8 = arith.constant dense<0.000000e+00> : vector<2x16x16xf32>
    %20 = tpu.matmul %17, %19, %cst_8 {dimension_numbers = #tpu.dot_dimension_numbers<[2], [2], [1], [1], [0, 0, 0, 1, 1, 1], [0], [0]>} : vector<2x16x32xbf16>, vector<2x16x32xbf16>, vector<2x16x16xf32> -> vector<2x16x16xf32>
    "tpu.trace_stop"() : () -> ()
    %c0_9 = arith.constant 0 : index
    %c0_10 = arith.constant 0 : index
    %c0_11 = arith.constant 0 : index
    %21 = vector.load %arg4[%c0_9, %c0_10, %c0_11] : memref<2x16x16xf32, #tpu.memory_space<vmem>>, vector<2x16x16xf32>
    tpu.vector_store %arg4[%c0_9, %c0_10, %c0_11], %20 {strides = array<i32>} : memref<2x16x16xf32, #tpu.memory_space<vmem>>, vector<2x16x16xf32>,
    return
  }
  func.func @transform_0(%arg0: i32) -> (i32, i32) {
    %c0_i32 = arith.constant 0 : i32
    %c0_i32_0 = arith.constant 0 : i32
    return %arg0, %c0_i32 : i32, i32
  }
  func.func @transform_1(%arg0: i32) -> (i32, i32) {
    %c0_i32 = arith.constant 0 : i32
    %c0_i32_0 = arith.constant 0 : i32
    %c0_i32_1 = arith.constant 0 : i32
    return %c0_i32, %c0_i32_0 : i32, i32
  }
  func.func @transform_2(%arg0: i32) -> (i32, i32) {
    %c0_i32 = arith.constant 0 : i32
    %c0_i32_0 = arith.constant 0 : i32
    %c0_i32_1 = arith.constant 0 : i32
    return %c0_i32, %c0_i32_0 : i32, i32
  }
  func.func @transform_3(%arg0: i32) -> (i32, i32, i32) {
    %c0_i32 = arith.constant 0 : i32
    %c0_i32_0 = arith.constant 0 : i32
    %c0_i32_1 = arith.constant 0 : i32
    return %arg0, %c0_i32, %c0_i32_0 : i32, i32, i32
  }
}

</mosaic_0001>

<llo_original>
// kernel: tpu_custom_call.1
$region0: #{tpu_custom_call.1}
  #allocation0 [shape = 'u32[]', space=smem, size = 0x4, offset = 0x4, fixed_abs, tag = 'smem constant byte address 0x4 - core index']
  #allocation1 [shape = 'u32[144,128]{1,0:T(1,128)}', space=vmem, size = 0x12000, scoped, tag = 'internal scratch']
  %s0 = inlined_call_operand.vmem [shape: bf16[32,16], index: 0, kind: input, shape index: {}]
  %s1 = inlined_call_operand.vmem [shape: bf16[80,64], index: 1, kind: input, shape index: {}]
  %s2 = inlined_call_operand.vmem [shape: f32[2,64], index: 2, kind: input, shape index: {}]
  %s3 = inlined_call_operand.hbm [shape: f32[2,16,16], index: 3, kind: output, shape index: {}]
  %s4 = sld [smem:[#allocation0]]
  $region22: #{tpu_custom_call.1} parent=0
    _
  %s6 = ssub.s32 1, %s4
  %s7 = scalar_select 0, %s6, %s4
  $region1: #{tpu_custom_call.1} parent=0
    #allocation2 [shape = 'u8[16384]{0}', space=vmem, size = 0x4000, scoped, tag = 'output window, operand 0, single buffered']
    #allocation3 [shape = 's32[1]{0}', space=sflag, size = 0x4, scoped, tag = 'scoped memory for tpu_custom_call.1']
    %8 = vsyncpa [#allocation3], 0
    // Predicated region
    $region2: #{tpu_custom_call.1} parent=1 // pred_check
      _
    $region3: #{tpu_custom_call.1} parent=1 // pred_check_branch
      %10 = sbr.rel (0) target = $region5
    $region4: #{tpu_custom_call.1} parent=1 // pred_region
      _
    $region5: #{tpu_custom_call.1} parent=1 // pred_fallthru
      _
    // Predicated region
    $region6: #{tpu_custom_call.1} parent=1 // pred_check
      _
    $region7: #{tpu_custom_call.1} parent=1 // pred_check_branch
      %12 = sbr.rel (0) target = $region9
    $region8: #{tpu_custom_call.1} parent=1 // pred_region
      _
    $region9: #{tpu_custom_call.1} parent=1 // pred_fallthru
      _
    // Predicated region
    $region10: #{tpu_custom_call.1} parent=1 // pred_check
      _
    $region11: #{tpu_custom_call.1} parent=1 // pred_check_branch
      %14 = sbr.rel (0) target = $region13
    $region12: #{tpu_custom_call.1} parent=1 // pred_region
      _
    $region13: #{tpu_custom_call.1} parent=1 // pred_fallthru
      _
    %v16 = vld [vmem:[%s0] sm:$0xf]
    %v17 = vld [vmem:[%s0 + $0x4] sm:$0xf]
    %v18 = vld [vmem:[%s0 + $0x8] sm:$0xf]
    %v19 = vld [vmem:[%s0 + $0xc] sm:$0xf]
    %v20 = vld [vmem:[%s2] sm:$0x3]
    %v21 = vld [vmem:[%s1] sm:$0xf]
    %v22 = vld [vmem:[%s1 + $0x4] sm:$0xf]
    %v23 = vld [vmem:[%s1 + $0x8] sm:$0xf]
    %v24 = vld [vmem:[%s1 + $0xc] sm:$0xf]
    %v25 = vld [vmem:[%s1 + $0x10] sm:$0xf]
    %v26 = vld [vmem:[%s1 + $0x14] sm:$0xf]
    %v27 = vld [vmem:[%s1 + $0x18] sm:$0xf]
    %v28 = vld [vmem:[%s1 + $0x1c] sm:$0xf]
    %v29 = vld [vmem:[%s1 + $0x20] sm:$0xf]
    %v30 = vld [vmem:[%s1 + $0x24] sm:$0xf]
    %v31 = vlaneseq
    %v32 = vshrl.u32 %v31, 7
    %v33 = vsub.s32 0, %v32
    %v34 = vrot.slane %v20, %v33
    %v39 = vunpack.c.l.b16 %v16
    %v40 = vunpack.c.l.b16 %v17
    %v41 = vunpack.c.l.b16 %v18
    %v42 = vunpack.c.l.b16 %v19
    %v43 = vpack.c.b16 %v40, %v39
    %v44 = vpack.c.b16 %v42, %v41
    %v47 = vunpack.c.l.b16 %v21
    %v48 = vunpack.c.l.b16 %v22
    %v49 = vpack.c.b16 %v48, %v47
    %vm51 = vcmask 130048
    %v53 = vsel %vm51, %v43, 0
    %v56 = vsel %vm51, %v44, 0
    %58 = vmatprep.subr.bf16.mxu0 0
    %59 = vmatpush1.bf16.msra.mxu0 %v49
    %60 = vmatprep.subr.bf16.mxu0 0
    %61 = vmatpush1.bf16.msra.mxu0 0
    %62 = vmatprep.subr.bf16.mxu0 0
    %63 = vmatpush1.bf16.msra.mxu0 0
    %64 = vmatprep.subr.bf16.mxu0 0
    %65 = vmatpush1.bf16.msra.mxu0 0
    %66 = vmatprep.subr.bf16.mxu0 0
    %67 = vmatpush1.bf16.msra.mxu0 0
    %68 = vmatprep.subr.bf16.mxu0 0
    %69 = vmatpush1.bf16.msra.mxu0 0
    %70 = vmatprep.subr.bf16.mxu0 0
    %71 = vmatpush1.bf16.msra.mxu0 0
    %72 = vmatprep.subr.bf16.mxu0 0
    %73 = vmatpush1.bf16.msra.mxu0 0
    %74 = vmatprep.subr.bf16.mxu0 0
    %75 = vmatpush1.bf16.msra.mxu0 0
    %76 = vmatprep.subr.bf16.mxu0 0
    %77 = vmatpush1.bf16.msra.mxu0 0
    %78 = vmatprep.subr.bf16.mxu0 0
    %79 = vmatpush1.bf16.msra.mxu0 0
    %80 = vmatprep.subr.bf16.mxu0 0
    %81 = vmatpush1.bf16.msra.mxu0 0
    %82 = vmatprep.subr.bf16.mxu0 0
    %83 = vmatpush1.bf16.msra.mxu0 0
    %84 = vmatprep.subr.bf16.mxu0 0
    %85 = vmatpush1.bf16.msra.mxu0 0
    %86 = vmatprep.subr.bf16.mxu0 0
    %87 = vmatpush1.bf16.msra.mxu0 0
    %88 = vmatprep.subr.bf16.mxu0 0
    %89 = vmatpush1.bf16.msra.mxu0 0
    %90 = vmatprep.mubr.bf16.mxu0 0
    %91 = vmatmul.mubr.bf16.gmra.mrb[0].mxu0 %v53
    %v92 = vpop.f32.mrb[0].mxu0
    %v93 = vadd.f32 %v34, %v92
    %v94 = vpop.f32.mrb[0].mxu0
    %v95 = vpop.f32.mrb[0].mxu0
    %v96 = vadd.f32 %v34, %v95
    %v97 = vpop.f32.mrb[0].mxu0
    %98 = vmatprep.mubr.bf16.mxu0 0
    %99 = vmatmul.mubr.bf16.gmra.mrb[0].mxu0 %v56
    %v100 = vpop.f32.mrb[0].mxu0
    %v101 = vadd.f32 %v34, %v100
    %v102 = vpop.f32.mrb[0].mxu0
    %v103 = vpop.f32.mrb[0].mxu0
    %v104 = vadd.f32 %v34, %v103
    %v105 = vpop.f32.mrb[0].mxu0
    %106 = vdwg.mxu0
    %v107 = vmax.f32 %v93, 0.0
    %v108 = vmax.f32 %v96, 0.0
    %v109 = vmax.f32 %v101, 0.0
    %v110 = vmax.f32 %v104, 0.0
    %v111 = vpack.c.bf16 %v108, %v107
    %v112 = vpack.c.bf16 %v110, %v109
    %v113 = vlaneseq
    %v114 = vshrl.u32 %v113, 7
    %v115 = vsub.s32 1, %v114
    %v116 = vrot.slane %v20, %v115
    %v125 = vunpack.c.l.b16 %v23
    %v126 = vunpack.c.l.b16 %v24
    %v127 = vunpack.c.l.b16 %v25
    %v128 = vunpack.c.l.b16 %v26
    %v129 = vunpack.c.l.b16 %v27
    %v130 = vunpack.c.l.b16 %v28
    %v131 = vunpack.c.l.b16 %v29
    %v132 = vunpack.c.l.b16 %v30
    %v133 = vpack.c.b16 %v126, %v125
    %v134 = vpack.c.b16 %v128, %v127
    %v135 = vpack.c.b16 %v130, %v129
    %v136 = vpack.c.b16 %v132, %v131
    %vm141 = vcmask 523264
    %v143 = vsel %vm141, %v111, 0
    %v146 = vsel %vm141, %v112, 0
    %148 = vmatprep.subr.bf16.mxu0 0
    %149 = vmatpush1.bf16.msra.mxu0 %v133
    %150 = vmatprep.subr.bf16.mxu0 0
    %151 = vmatpush1.bf16.msra.mxu0 %v134
    %152 = vmatprep.subr.bf16.mxu0 0
    %153 = vmatpush1.bf16.msra.mxu0 %v135
    %154 = vmatprep.subr.bf16.mxu0 0
    %155 = vmatpush1.bf16.msra.mxu0 %v136
    %156 = vmatprep.subr.bf16.mxu0 0
    %157 = vmatpush1.bf16.msra.mxu0 0
    %158 = vmatprep.subr.bf16.mxu0 0
    %159 = vmatpush1.bf16.msra.mxu0 0
    %160 = vmatprep.subr.bf16.mxu0 0
    %161 = vmatpush1.bf16.msra.mxu0 0
    %162 = vmatprep.subr.bf16.mxu0 0
    %163 = vmatpush1.bf16.msra.mxu0 0
    %164 = vmatprep.subr.bf16.mxu0 0
    %165 = vmatpush1.bf16.msra.mxu0 0
    %166 = vmatprep.subr.bf16.mxu0 0
    %167 = vmatpush1.bf16.msra.mxu0 0
    %168 = vmatprep.subr.bf16.mxu0 0
    %169 = vmatpush1.bf16.msra.mxu0 0
    %170 = vmatprep.subr.bf16.mxu0 0
    %171 = vmatpush1.bf16.msra.mxu0 0
    %172 = vmatprep.subr.bf16.mxu0 0
    %173 = vmatpush1.bf16.msra.mxu0 0
    %174 = vmatprep.subr.bf16.mxu0 0
    %175 = vmatpush1.bf16.msra.mxu0 0
    %176 = vmatprep.subr.bf16.mxu0 0
    %177 = vmatpush1.bf16.msra.mxu0 0
    %178 = vmatprep.subr.bf16.mxu0 0
    %179 = vmatpush1.bf16.msra.mxu0 0
    %180 = vmatprep.mubr.bf16.mxu0 0
    %181 = vmatmul.mubr.bf16.gmra.mrb[0].mxu0 %v143
    %v182 = vpop.f32.mrb[0].mxu0
    %v183 = vadd.f32 %v116, %v182
    %v184 = vpop.f32.mrb[0].mxu0
    %v185 = vpop.f32.mrb[0].mxu0
    %v186 = vadd.f32 %v116, %v185
    %v187 = vpop.f32.mrb[0].mxu0
    %188 = vmatprep.mubr.bf16.mxu0 0
    %189 = vmatmul.mubr.bf16.gmra.mrb[0].mxu0 %v146
    %v190 = vpop.f32.mrb[0].mxu0
    %v191 = vadd.f32 %v116, %v190
    %v192 = vpop.f32.mrb[0].mxu0
    %v193 = vpop.f32.mrb[0].mxu0
    %v194 = vadd.f32 %v116, %v193
    %v195 = vpop.f32.mrb[0].mxu0
    %196 = vdwg.mxu0
    %v197 = vpack.c.bf16 %v186, %v183
    %v198 = vpack.c.bf16 %v194, %v191
    %200 = vrot.lane.b32.xlu0 %v197, 96
    %v201 = vpop.permute.xlu0 %200
    %vm202 = vcmask 261120
    %v204 = vsel %vm202, %v197, 0
    %v207 = vsel %vm202, %v201, 0
    %209 = vmatprep.subr.bf16.mxu0 0
    %210 = vmatpush1.bf16.xpose.msra.mxu0 %v207
    %211 = vmatprep.subr.bf16.mxu0 0
    %212 = vmatpush1.bf16.xpose.msra.mxu0 0
    %213 = vmatprep.subr.bf16.mxu0 0
    %214 = vmatpush1.bf16.xpose.msra.mxu0 0
    %215 = vmatprep.subr.bf16.mxu0 0
    %216 = vmatpush1.bf16.xpose.msra.mxu0 0
    %217 = vmatprep.subr.bf16.mxu0 0
    %218 = vmatpush1.bf16.xpose.msra.mxu0 0
    %219 = vmatprep.subr.bf16.mxu0 0
    %220 = vmatpush1.bf16.xpose.msra.mxu0 0
    %221 = vmatprep.subr.bf16.mxu0 0
    %222 = vmatpush1.bf16.xpose.msra.mxu0 0
    %223 = vmatprep.subr.bf16.mxu0 0
    %224 = vmatpush1.bf16.xpose.msra.mxu0 0
    %225 = vmatprep.subr.bf16.mxu0 0
    %226 = vmatpush1.bf16.xpose.msra.mxu0 0
    %227 = vmatprep.subr.bf16.mxu0 0
    %228 = vmatpush1.bf16.xpose.msra.mxu0 0
    %229 = vmatprep.subr.bf16.mxu0 0
    %230 = vmatpush1.bf16.xpose.msra.mxu0 0
    %231 = vmatprep.subr.bf16.mxu0 0
    %232 = vmatpush1.bf16.xpose.msra.mxu0 0
    %233 = vmatprep.subr.bf16.mxu0 0
    %234 = vmatpush1.bf16.xpose.msra.mxu0 0
    %235 = vmatprep.subr.bf16.mxu0 0
    %236 = vmatpush1.bf16.xpose.msra.mxu0 0
    %237 = vmatprep.subr.bf16.mxu0 0
    %238 = vmatpush1.bf16.xpose.msra.mxu0 0
    %239 = vmatprep.subr.bf16.mxu0 0
    %240 = vmatpush1.bf16.xpose.msra.mxu0 0
    %241 = vmatprep.mubr.bf16.mxu0 0
    %242 = vmatmul.mubr.bf16.gmra.mrb[0].mxu0 %v204
    %v243 = vpop.f32.mrb[0].mxu0
    %v244 = vadd.f32 0.0, %v243
    %v245 = vpop.f32.mrb[0].mxu0
    %v246 = vpop.f32.mrb[0].mxu0
    %v247 = vadd.f32 0.0, %v246
    %v248 = vpop.f32.mrb[0].mxu0
    %249 = vdwg.mxu0
    %251 = vrot.lane.b32.xlu0 %v198, 96
    %v252 = vpop.permute.xlu0 %251
    %v254 = vsel %vm202, %v198, 0
    %v257 = vsel %vm202, %v252, 0
    %259 = vmatprep.subr.bf16.mxu0 0
    %260 = vmatpush1.bf16.xpose.msra.mxu0 %v257
    %261 = vmatprep.subr.bf16.mxu0 0
    %262 = vmatpush1.bf16.xpose.msra.mxu0 0
    %263 = vmatprep.subr.bf16.mxu0 0
    %264 = vmatpush1.bf16.xpose.msra.mxu0 0
    %265 = vmatprep.subr.bf16.mxu0 0
    %266 = vmatpush1.bf16.xpose.msra.mxu0 0
    %267 = vmatprep.subr.bf16.mxu0 0
    %268 = vmatpush1.bf16.xpose.msra.mxu0 0
    %269 = vmatprep.subr.bf16.mxu0 0
    %270 = vmatpush1.bf16.xpose.msra.mxu0 0
    %271 = vmatprep.subr.bf16.mxu0 0
    %272 = vmatpush1.bf16.xpose.msra.mxu0 0
    %273 = vmatprep.subr.bf16.mxu0 0
    %274 = vmatpush1.bf16.xpose.msra.mxu0 0
    %275 = vmatprep.subr.bf16.mxu0 0
    %276 = vmatpush1.bf16.xpose.msra.mxu0 0
    %277 = vmatprep.subr.bf16.mxu0 0
    %278 = vmatpush1.bf16.xpose.msra.mxu0 0
    %279 = vmatprep.subr.bf16.mxu0 0
    %280 = vmatpush1.bf16.xpose.msra.mxu0 0
    %281 = vmatprep.subr.bf16.mxu0 0
    %282 = vmatpush1.bf16.xpose.msra.mxu0 0
    %283 = vmatprep.subr.bf16.mxu0 0
    %284 = vmatpush1.bf16.xpose.msra.mxu0 0
    %285 = vmatprep.subr.bf16.mxu0 0
    %286 = vmatpush1.bf16.xpose.msra.mxu0 0
    %287 = vmatprep.subr.bf16.mxu0 0
    %288 = vmatpush1.bf16.xpose.msra.mxu0 0
    %289 = vmatprep.subr.bf16.mxu0 0
    %290 = vmatpush1.bf16.xpose.msra.mxu0 0
    %291 = vmatprep.mubr.bf16.mxu0 0
    %292 = vmatmul.mubr.bf16.gmra.mrb[0].mxu0 %v254
    %v293 = vpop.f32.mrb[0].mxu0
    %v294 = vadd.f32 0.0, %v293
    %v295 = vpop.f32.mrb[0].mxu0
    %v296 = vpop.f32.mrb[0].mxu0
    %v297 = vadd.f32 0.0, %v296
    %v298 = vpop.f32.mrb[0].mxu0
    %299 = vdwg.mxu0
    %300 = vst.msk [vmem:[#allocation2] sm:$0xff] %vm51, %v244
    %301 = vst.msk [vmem:[#allocation2 + $0x8] sm:$0xff] %vm51, %v247
    %302 = vst.msk [vmem:[#allocation2 + $0x10] sm:$0xff] %vm51, %v294
    %303 = vst.msk [vmem:[#allocation2 + $0x18] sm:$0xff] %vm51, %v297
    // Predicated region
    $region14: #{tpu_custom_call.1} parent=1 // pred_check
      _
    $region15: #{tpu_custom_call.1} parent=1 // pred_check_branch
      %305 = sbr.rel (0) target = $region17
    $region16: #{tpu_custom_call.1} parent=1 // pred_region
      %s307 = ssub.s32 512, 512
      %308 = vsyncadd [#allocation3], %s307
      %s309 = sshll.u32 [#allocation2], 4
      %s310 = int_to_ptr.vmem [resolvable:$true] %s309
      %315 = dma.vmem_to_hbm [thread:$0]  %s310, 512, %s3, [#allocation3], 128, 128, 8
    $region17: #{tpu_custom_call.1} parent=1 // pred_fallthru
      _
    // Predicated region
    $region18: #{tpu_custom_call.1} parent=1 // pred_check
      _
    $region19: #{tpu_custom_call.1} parent=1 // pred_check_branch
      %317 = sbr.rel (0) target = $region21
    $region20: #{tpu_custom_call.1} parent=1 // pred_region
      %318 = dma.done [#allocation3], 512
    $region21: #{tpu_custom_call.1} parent=1 // pred_fallthru
      _
    %319 = vsyncpa [#allocation3], 1

</llo_original>
